<compile_context>
chip_gen: v7x
topology: tpu7x:2x2x1
jax: 0.10.0
libtpu: 0.0.40
codegen_flags: <defaults>
</compile_context>

<pallas_src>
import functools

import jax
import jax.numpy as jnp
from jax.experimental import pallas as pl
from jax.experimental.pallas import tpu as pltpu


# -----------------------------------------------------------------------------
# PE table construction (parameter setup, plain JAX)
# -----------------------------------------------------------------------------
def make_pe_table(d_model: int, max_len: int = 512) -> jnp.ndarray:
    position = jnp.arange(max_len, dtype=jnp.float32)[:, None]            # (L, 1)
    div_term = jnp.exp(
        jnp.arange(0, d_model, 2, dtype=jnp.float32)
        * (-jnp.log(jnp.float32(10000.0)) / d_model)
    )                                                                      # (D/2,)
    pe = jnp.zeros((max_len, d_model), dtype=jnp.float32)
    pe = pe.at[:, 0::2].set(jnp.sin(position * div_term))
    pe = pe.at[:, 1::2].set(jnp.cos(position * div_term))
    return pe                                                              # (L, D)


# -----------------------------------------------------------------------------
# Pallas kernel
# -----------------------------------------------------------------------------
def _pe_kernel(seed_ref, x_ref, pe_ref, o_ref, *, p: float, training: bool,
               row_len: int):
    # x_ref/o_ref: (B, TC) VMEM block of the flattened (B, S*D) tensor.
    # pe_ref:      (1, TC) VMEM block of the flattened PE row (broadcast over B).
    y = x_ref[...] + pe_ref[...]

    if training and p > 0.0:
        if p >= 1.0:
            y = jnp.zeros_like(y)
        else:
            nrows, ncols = x_ref.shape
            chunk0 = pl.program_id(0) * ncols
            row = jax.lax.broadcasted_iota(jnp.int32, (nrows, ncols), 0)
            col = jax.lax.broadcasted_iota(jnp.int32, (nrows, ncols), 1)
            # Global element index -> counter-based hash -> uniform bits.
            # TODO(synk): cannot bitwise-match torch's RNG stream; semantics
            # (drop prob p, scale 1/(1-p)) match.
            idx = (row * row_len + chunk0 + col).astype(jnp.uint32)
            seed_u = seed_ref[0].astype(jnp.uint32)
            h = idx ^ (seed_u * jnp.uint32(0x9E3779B9))
            h = h ^ (h >> 16)
            h = h * jnp.uint32(0x85EBCA6B)
            h = h ^ (h >> 13)
            h = h * jnp.uint32(0xC2B2AE35)
            h = h ^ (h >> 16)
            # Integer-threshold compare on the low 31 bits (signed-safe).
            h31 = (h & jnp.uint32(0x7FFFFFFF)).astype(jnp.int32)
            thr = jnp.int32(min(int(round(p * 2147483648.0)), 2147483647))
            keep = h31 >= thr
            y = jnp.where(keep, y, jnp.float32(0.0)) * jnp.float32(1.0 / (1.0 - p))

    o_ref[...] = y.astype(o_ref.dtype)


def positional_encoding(
    x: jnp.ndarray,
    pe_table: jnp.ndarray,
    *,
    p: float = 0.1,
    training: bool = False,
    seed: int = 0,
) -> jnp.ndarray:
    """x: (B, S, D). Returns dropout(x + pe[:S, :]) with PyTorch semantics."""
    B, S, D = x.shape
    if S > pe_table.shape[0]:
        raise ValueError(f"seq len {S} exceeds max_len {pe_table.shape[0]}")

    row_len = S * D
    x2d = x.reshape(B, row_len)                       # lane-dense last axis
    pe2d = pe_table[:S, :].reshape(1, row_len)
    seed_arr = jnp.array([seed], dtype=jnp.int32)

    # Pick a chunk width along the flattened axis: ~2 MiB per x block, lane
    # multiple of 128 when tiling, bounded VMEM on all generations.
    LANE = 128
    target_bytes = 2 * 1024 * 1024
    max_cols = max(LANE, target_bytes // (4 * B))
    if row_len <= max_cols:
        tc = row_len                                  # single full-width block
    else:
        tc = (max_cols // LANE) * LANE
    num_chunks = pl.cdiv(row_len, tc)

    kernel = functools.partial(
        _pe_kernel, p=float(p), training=bool(training), row_len=row_len
    )

    out2d = pl.pallas_call(
        kernel,
        out_shape=jax.ShapeDtypeStruct((B, row_len), x.dtype),
        grid_spec=pltpu.PrefetchScalarGridSpec(
            num_scalar_prefetch=1,
            grid=(num_chunks,),
            in_specs=[
                pl.BlockSpec((B, tc), lambda c, seed: (0, c)),
                pl.BlockSpec((1, tc), lambda c, seed: (0, c)),
            ],
            out_specs=pl.BlockSpec((B, tc), lambda c, seed: (0, c)),
        ),
        compiler_params=pltpu.CompilerParams(
            dimension_semantics=("parallel",),        # independent chunks
            vmem_limit_bytes=32 * 1024 * 1024,
        ),
    )(seed_arr, x2d, pe2d)

    return out2d.reshape(B, S, D)


# -----------------------------------------------------------------------------
# Demo / self-check
# -----------------------------------------------------------------------------
if __name__ == "__main__":
    key = jax.random.PRNGKey(0)
    B, S, D = 2, 8, 32          # batch=2, seq=8, d_model=32
    max_len = 512

    x = jax.random.normal(key, (B, S, D), dtype=jnp.float32)
    pe_table = make_pe_table(D, max_len)

    # Eval mode (dropout = identity): deterministic, check vs pure-JAX reference.
    out_eval = positional_encoding(x, pe_table, p=0.1, training=False)
    out_eval = jax.block_until_ready(out_eval)
    ref = x + pe_table[None, :S, :]
    assert out_eval.shape == (B, S, D)
    assert jnp.allclose(out_eval, ref, atol=1e-6, rtol=1e-6)

    # Training mode (in-kernel hash-based dropout): run and sanity-check.
    out_train = positional_encoding(x, pe_table, p=0.1, training=True, seed=123)
    out_train = jax.block_until_ready(out_train)
    assert out_train.shape == (B, S, D)
    assert bool(jnp.all(jnp.isfinite(out_train)))

    print("KERNEL_OK")
</pallas_src>

<mosaic_0001>
module attributes {stable_mosaic.version = 11 : i64} {
  func.func @_pe_kernel(%arg0: i32, %arg1: memref<1xi32, #tpu.memory_space<smem>>, %arg2: memref<2x256xf32, #tpu.memory_space<vmem>>, %arg3: memref<1x256xf32, #tpu.memory_space<vmem>>, %arg4: memref<2x256xf32, #tpu.memory_space<vmem>>) attributes {dimension_semantics = [#tpu.dimension_semantics<parallel>], iteration_bounds = array<i64: 1>, scalar_prefetch = 1 : i64, scratch_operands = 0 : i64, tpu.core_type = #tpu.core_type<tc>, window_params = [{transform_indices = @transform_0, window_bounds = array<i64: 2, 256>}, {transform_indices = @transform_1, window_bounds = array<i64: 1, 256>}, {transform_indices = @transform_2, window_bounds = array<i64: 2, 256>}]} {
    %c0 = arith.constant 0 : index
    %c0_0 = arith.constant 0 : index
    %0 = vector.load %arg2[%c0, %c0_0] : memref<2x256xf32, #tpu.memory_space<vmem>>, vector<2x256xf32>
    %c0_1 = arith.constant 0 : index
    %c0_2 = arith.constant 0 : index
    %1 = vector.load %arg3[%c0_1, %c0_2] : memref<1x256xf32, #tpu.memory_space<vmem>>, vector<1x256xf32>
    %2 = vector.broadcast %1 : vector<1x256xf32> to vector<2x256xf32>
    %3 = arith.addf %0, %2 : vector<2x256xf32>
    %c0_3 = arith.constant 0 : index
    %c0_4 = arith.constant 0 : index
    %4 = vector.load %arg4[%c0_3, %c0_4] : memref<2x256xf32, #tpu.memory_space<vmem>>, vector<2x256xf32>
    tpu.vector_store %arg4[%c0_3, %c0_4], %3 {strides = array<i32>} : memref<2x256xf32, #tpu.memory_space<vmem>>, vector<2x256xf32>,
    return
  }
  func.func @transform_0(%arg0: i32, %arg1: memref<1xi32, #tpu.memory_space<smem>>) -> (i32, i32) {
    %c0_i32 = arith.constant 0 : i32
    %c0_i32_0 = arith.constant 0 : i32
    return %c0_i32, %arg0 : i32, i32
  }
  func.func @transform_1(%arg0: i32, %arg1: memref<1xi32, #tpu.memory_space<smem>>) -> (i32, i32) {
    %c0_i32 = arith.constant 0 : i32
    %c0_i32_0 = arith.constant 0 : i32
    return %c0_i32, %arg0 : i32, i32
  }
  func.func @transform_2(%arg0: i32, %arg1: memref<1xi32, #tpu.memory_space<smem>>) -> (i32, i32) {
    %c0_i32 = arith.constant 0 : i32
    %c0_i32_0 = arith.constant 0 : i32
    return %c0_i32, %arg0 : i32, i32
  }
}

</mosaic_0001>

<llo_original>
// kernel: tpu_custom_call.1
$region0: #{tpu_custom_call.1}
  #allocation0 [shape = 'u32[]', space=smem, size = 0x4, offset = 0x4, fixed_abs, tag = 'smem constant byte address 0x4 - core index']
  #allocation1 [shape = 'u32[144,128]{1,0:T(1,128)}', space=vmem, size = 0x12000, scoped, tag = 'internal scratch']
  #allocation2 [shape = 's32[1]{0}', space=sflag, size = 0x4, scoped, tag = 'scoped memory for tpu_custom_call.1']
  #allocation3 [shape = 's32[1]{0:T(128)S(6)}', space=smem, size = 0x200, scoped, tag = 'prefetched SMEM operand 0']
  %s0 = inlined_call_operand.<no memory space> [shape: s32[1], index: 0, kind: input, shape index: {}]
  %s1 = inlined_call_operand.hbm [shape: f32[2,256], index: 1, kind: input, shape index: {}]
  %s2 = inlined_call_operand.vmem [shape: f32[1,256], index: 2, kind: input, shape index: {}]
  %s3 = inlined_call_operand.hbm [shape: f32[2,256], index: 3, kind: output, shape index: {}]
  %s4 = sld [smem:[#allocation0]]
  $region22: #{tpu_custom_call.1} parent=0
    _
  %s6 = ssub.s32 1, %s4
  %s7 = scalar_select 0, %s6, %s4
  %8 = sst [smem:[#allocation3]] %s0
  $region1: #{tpu_custom_call.1} parent=0
    #allocation4 [shape = 'u8[2048]{0}', space=vmem, size = 0x800, scoped, tag = 'input window, operand 1, single buffered']
    #allocation5 [shape = 's32[1]{0}', space=sflag, size = 0x4, scoped, tag = 'scoped memory for tpu_custom_call.1']
    #allocation6 [shape = 's32[1]{0}', space=sflag, size = 0x4, scoped, tag = 'scoped memory for tpu_custom_call.1']
    #allocation7 [shape = 'u8[2048]{0}', space=vmem, size = 0x800, scoped, tag = 'output window, operand 0, single buffered']
    %9 = vsyncpa [#allocation5], 0
    %10 = vsyncpa [#allocation6], 0
    // Predicated region
    $region2: #{tpu_custom_call.1} parent=1 // pred_check
      _
    $region3: #{tpu_custom_call.1} parent=1 // pred_check_branch
      %12 = sbr.rel (0) target = $region5
    $region4: #{tpu_custom_call.1} parent=1 // pred_region
      %s14 = ssub.s32 64, 64
      %15 = vsyncadd [#allocation5], %s14
      %s17 = sshll.u32 [#allocation4], 4
      %s18 = int_to_ptr.vmem [resolvable:$true] %s17
      %20 = dma.hbm_to_vmem [thread:$0]  %s1, 64, %s18, [#allocation5]
    $region5: #{tpu_custom_call.1} parent=1 // pred_fallthru
      _
    // Predicated region
    $region6: #{tpu_custom_call.1} parent=1 // pred_check
      _
    $region7: #{tpu_custom_call.1} parent=1 // pred_check_branch
      %22 = sbr.rel (0) target = $region9
    $region8: #{tpu_custom_call.1} parent=1 // pred_region
      _
    $region9: #{tpu_custom_call.1} parent=1 // pred_fallthru
      _
    // Predicated region
    $region10: #{tpu_custom_call.1} parent=1 // pred_check
      _
    $region11: #{tpu_custom_call.1} parent=1 // pred_check_branch
      %24 = sbr.rel (0) target = $region13
    $region12: #{tpu_custom_call.1} parent=1 // pred_region
      %25 = dma.done [#allocation5], 64
    $region13: #{tpu_custom_call.1} parent=1 // pred_fallthru
      _
    %v26 = vld [vmem:[#allocation4] sm:$0xf]
    %v27 = vld [vmem:[%s2] sm:$0x3]
    %v29 = vlaneseq
    %v30 = vshrl.u32 %v29, 7
    %v31 = vsub.s32 0, %v30
    %v32 = vrot.slane %v27, %v31
    %v33 = vlaneseq
    %v34 = vshrl.u32 %v33, 7
    %v35 = vsub.s32 1, %v34
    %v36 = vrot.slane %v27, %v35
    %v37 = vcombine.low %v32, %v36
    %v39 = vunpack.c.l.s4 1983009808
    %v40 = vunpack.c.0.s8 %v39
    %v41 = vlaneseq
    %v42 = vshrl.u32 %v41, 7
    %v43 = vsub.s32 %v40, %v42
    %v44 = vrot.slane %v37, %v43
    %v46 = vadd.f32 %v26, %v44
    %47 = vst [vmem:[#allocation7] sm:$0xf] %v46
    // Predicated region
    $region14: #{tpu_custom_call.1} parent=1 // pred_check
      _
    $region15: #{tpu_custom_call.1} parent=1 // pred_check_branch
      %49 = sbr.rel (0) target = $region17
    $region16: #{tpu_custom_call.1} parent=1 // pred_region
      %s51 = ssub.s32 64, 64
      %52 = vsyncadd [#allocation6], %s51
      %s54 = sshll.u32 [#allocation7], 4
      %s55 = int_to_ptr.vmem [resolvable:$true] %s54
      %57 = dma.vmem_to_hbm [thread:$0]  %s55, 64, %s3, [#allocation6]
    $region17: #{tpu_custom_call.1} parent=1 // pred_fallthru
      _
    // Predicated region
    $region18: #{tpu_custom_call.1} parent=1 // pred_check
      _
    $region19: #{tpu_custom_call.1} parent=1 // pred_check_branch
      %59 = sbr.rel (0) target = $region21
    $region20: #{tpu_custom_call.1} parent=1 // pred_region
      %60 = dma.done [#allocation6], 64
    $region21: #{tpu_custom_call.1} parent=1 // pred_fallthru
      _
    %61 = vsyncpa [#allocation5], 1
    %62 = vsyncpa [#allocation6], 1

</llo_original>
